<compile_context>
chip_gen: v5e
topology: v5e:2x2
jax: 0.10.0
libtpu: 0.0.40
codegen_flags: <defaults>
</compile_context>

<pallas_src>
import functools

import jax
import jax.numpy as jnp
from jax.experimental import pallas as pl
from jax.experimental.pallas import tpu as pltpu

LANE = 128
SUBLANE = 8


def _round_up(n, m):
    return ((n + m - 1) // m) * m


def mlp_kernel(x_ref, w1_ref, b1_ref, w2_ref, b2_ref, o_ref, *, n_out):
    # hidden = relu(x @ W1 + b1); W1/b1 are lane-dense (last dim = 128).
    h = jnp.dot(x_ref[...], w1_ref[...], preferred_element_type=jnp.float32)
    h = jnp.maximum(h + b1_ref[...], 0.0)            # (tb, H) + (1, H) broadcast
    # out = h @ W2 + b2   (no activation, matches self.predict)
    o = jnp.dot(h, w2_ref[...], preferred_element_type=jnp.float32) + b2_ref[...]
    # n_out == H-padded width (no-op slice) for the lane-dense small-batch path,
    # or the true n_output for the narrow large-batch path.
    o_ref[...] = o[:, :n_out].astype(o_ref.dtype)


def pad_params(w1, b1, w2, b2):
    """Pad PyTorch-layout Linear params once (call at init time, not per step).

    w1: (n_hidden, n_feature), b1: (n_hidden,)
    w2: (n_output, n_hidden),  b2: (n_output,)
    Returns params in (in, out) layout with out dims zero-padded to 128 lanes.
    """
    n_hidden, n_feature = w1.shape
    n_output = w2.shape[0]
    H = _round_up(n_hidden, LANE)
    N = _round_up(n_output, LANE)
    w1_p = jnp.zeros((n_feature, H), jnp.float32).at[:, :n_hidden].set(w1.T)
    b1_p = jnp.zeros((1, H), jnp.float32).at[0, :n_hidden].set(b1)
    w2_p = jnp.zeros((H, N), jnp.float32).at[:n_hidden, :n_output].set(w2.T)
    b2_p = jnp.zeros((1, N), jnp.float32).at[0, :n_output].set(b2)
    return (w1_p, b1_p, w2_p, b2_p), n_output


def net_forward(x, padded_params, n_output, *, batch_tile=1024):
    """Forward pass of the 2-layer MLP.  x: (B, n_feature) f32."""
    w1_p, b1_p, w2_p, b2_p = padded_params
    B, n_feature = x.shape
    H = w1_p.shape[1]
    N = w2_p.shape[1]

    # --- batch tiling ---------------------------------------------------------
    # Small batches: one grid step (latency regime, ~0.35us fixed cost/step).
    # Large batches: big tiles to amortize step overhead; grid >= 2 engages both
    # TensorCores on v7x via dimension_semantics=("parallel",).
    B8 = _round_up(max(B, SUBLANE), SUBLANE)
    tb = B8 if B8 <= batch_tile else batch_tile
    B_pad = _round_up(B, tb)
    single_step = (B_pad == tb)

    # Lane-dense (128-wide, unmasked vst) output only in the tiny/latency-bound
    # case; narrow (B_pad, n_output) output for large B to avoid 64x writeback.
    n_out_block = N if single_step else n_output

    x_p = x.astype(jnp.float32)
    if B_pad != B:
        x_p = jnp.zeros((B_pad, n_feature), jnp.float32).at[:B].set(x_p)

    # Advisory cost hint from bytes/flops actually touched (weights resident).
    flops = 2 * B_pad * n_feature * H + 2 * B_pad * H * n_out_block + 2 * B_pad * H
    bytes_accessed = 4 * (x_p.size + w1_p.size + b1_p.size + w2_p.size +
                          b2_p.size + B_pad * n_out_block)

    out = pl.pallas_call(
        functools.partial(mlp_kernel, n_out=n_out_block),
        out_shape=jax.ShapeDtypeStruct((B_pad, n_out_block), jnp.float32),
        grid_spec=pltpu.PrefetchScalarGridSpec(
            num_scalar_prefetch=0,
            grid=(B_pad // tb,),
            in_specs=[
                # activations: walk the batch axis; feature dim = full array dim
                pl.BlockSpec((tb, n_feature), lambda i: (i, 0)),
                # weights / biases: constant block index -> resident in VMEM
                pl.BlockSpec((n_feature, H), lambda i: (0, 0)),
                pl.BlockSpec((1, H), lambda i: (0, 0)),
                pl.BlockSpec((H, N), lambda i: (0, 0)),
                pl.BlockSpec((1, N), lambda i: (0, 0)),
            ],
            out_specs=pl.BlockSpec((tb, n_out_block), lambda i: (i, 0)),
        ),
        compiler_params=pltpu.CompilerParams(
            dimension_semantics=("parallel",)),
        cost_estimate=pl.CostEstimate(
            flops=flops, transcendentals=0, bytes_accessed=bytes_accessed),
    )(x_p, w1_p, b1_p, w2_p, b2_p)

    # Strip batch padding (and lane padding in the single-step path).
    return out[:B, :n_output]


def net_reference(x, w1, b1, w2, b2):
    h = jnp.maximum(x @ w1.T + b1, 0.0)
    return h @ w2.T + b2


if __name__ == "__main__":
    # Shapes implied by the original script: Net(n_feature=2, n_hidden=10, n_output=2)
    # applied to x of shape (200, 2).
    n_feature, n_hidden, n_output = 2, 10, 2
    batch = 200

    key = jax.random.PRNGKey(0)
    k_x0, k_x1, k_w1, k_b1, k_w2, k_b2 = jax.random.split(key, 6)

    # Two gaussian clusters around (+2, +2) and (-2, -2), independent noise.
    x_pos = 2.0 + jax.random.normal(k_x0, (batch // 2, n_feature), jnp.float32)
    x_neg = -2.0 + jax.random.normal(k_x1, (batch // 2, n_feature), jnp.float32)
    x = jnp.concatenate([x_pos, x_neg], axis=0)

    # Deterministic parameter init (PyTorch Linear layout: (out, in) weights).
    w1 = 0.5 * jax.random.normal(k_w1, (n_hidden, n_feature), jnp.float32)
    b1 = 0.1 * jax.random.normal(k_b1, (n_hidden,), jnp.float32)
    w2 = 0.5 * jax.random.normal(k_w2, (n_output, n_hidden), jnp.float32)
    b2 = 0.1 * jax.random.normal(k_b2, (n_output,), jnp.float32)

    # Pad weights ONCE (outside the forward path) and run the forward pass.
    padded_params, n_out = pad_params(w1, b1, w2, b2)
    out = net_forward(x, padded_params, n_out)      # B=200 -> single grid step
    out = jax.block_until_ready(out)

    ref = net_reference(x, w1, b1, w2, b2)
    assert out.shape == (batch, n_output)
    assert jnp.allclose(out, ref, atol=1e-5, rtol=1e-5)

    print("KERNEL_OK")
</pallas_src>

<mosaic_0001>
module attributes {stable_mosaic.version = 11 : i64} {
  func.func @mlp_kernel(%arg0: i32, %arg1: memref<200x2xf32, #tpu.memory_space<vmem>>, %arg2: memref<2x128xf32, #tpu.memory_space<vmem>>, %arg3: memref<1x128xf32, #tpu.memory_space<vmem>>, %arg4: memref<128x128xf32, #tpu.memory_space<vmem>>, %arg5: memref<1x128xf32, #tpu.memory_space<vmem>>, %arg6: memref<200x128xf32, #tpu.memory_space<vmem>>) attributes {dimension_semantics = [#tpu.dimension_semantics<parallel>], iteration_bounds = array<i64: 1>, scalar_prefetch = 0 : i64, scratch_operands = 0 : i64, tpu.core_type = #tpu.core_type<tc>, window_params = [{transform_indices = @transform_0, window_bounds = array<i64: 200, 2>}, {pipeline_mode = #tpu.pipeline_mode<synchronous>, transform_indices = @transform_1, window_bounds = array<i64: 2, 128>}, {pipeline_mode = #tpu.pipeline_mode<synchronous>, transform_indices = @transform_2, window_bounds = array<i64: 1, 128>}, {pipeline_mode = #tpu.pipeline_mode<synchronous>, transform_indices = @transform_3, window_bounds = array<i64: 128, 128>}, {pipeline_mode = #tpu.pipeline_mode<synchronous>, transform_indices = @transform_4, window_bounds = array<i64: 1, 128>}, {transform_indices = @transform_5, window_bounds = array<i64: 200, 128>}]} {
    %c0 = arith.constant 0 : index
    %c0_0 = arith.constant 0 : index
    %0 = vector.load %arg1[%c0, %c0_0] : memref<200x2xf32, #tpu.memory_space<vmem>>, vector<200x2xf32>
    %c0_1 = arith.constant 0 : index
    %c0_2 = arith.constant 0 : index
    %1 = vector.load %arg2[%c0_1, %c0_2] : memref<2x128xf32, #tpu.memory_space<vmem>>, vector<2x128xf32>
    %cst = arith.constant dense<0.000000e+00> : vector<200x128xf32>
    %2 = tpu.matmul %0, %1, %cst {dimension_numbers = #tpu.dot_dimension_numbers<[1], [0], [0], [1], [0, 0, 1, 1], [], []>} : vector<200x2xf32>, vector<2x128xf32>, vector<200x128xf32> -> vector<200x128xf32>
    %c0_3 = arith.constant 0 : index
    %c0_4 = arith.constant 0 : index
    %3 = vector.load %arg3[%c0_3, %c0_4] : memref<1x128xf32, #tpu.memory_space<vmem>>, vector<1x128xf32>
    %4 = vector.broadcast %3 : vector<1x128xf32> to vector<200x128xf32>
    %5 = arith.addf %2, %4 : vector<200x128xf32>
    %cst_5 = arith.constant 0.000000e+00 : f32
    %6 = vector.broadcast %cst_5 : f32 to vector<200x128xf32>
    %7 = arith.maximumf %5, %6 : vector<200x128xf32>
    %c0_6 = arith.constant 0 : index
    %c0_7 = arith.constant 0 : index
    %8 = vector.load %arg4[%c0_6, %c0_7] : memref<128x128xf32, #tpu.memory_space<vmem>>, vector<128x128xf32>
    %cst_8 = arith.constant dense<0.000000e+00> : vector<200x128xf32>
    %9 = tpu.matmul %7, %8, %cst_8 {dimension_numbers = #tpu.dot_dimension_numbers<[1], [0], [0], [1], [0, 0, 1, 1], [], []>} : vector<200x128xf32>, vector<128x128xf32>, vector<200x128xf32> -> vector<200x128xf32>
    %c0_9 = arith.constant 0 : index
    %c0_10 = arith.constant 0 : index
    %10 = vector.load %arg5[%c0_9, %c0_10] : memref<1x128xf32, #tpu.memory_space<vmem>>, vector<1x128xf32>
    %11 = vector.broadcast %10 : vector<1x128xf32> to vector<200x128xf32>
    %12 = arith.addf %9, %11 : vector<200x128xf32>
    %c0_11 = arith.constant 0 : index
    %c0_12 = arith.constant 0 : index
    %13 = vector.load %arg6[%c0_11, %c0_12] : memref<200x128xf32, #tpu.memory_space<vmem>>, vector<200x128xf32>
    tpu.vector_store %arg6[%c0_11, %c0_12], %12 {strides = array<i32>} : memref<200x128xf32, #tpu.memory_space<vmem>>, vector<200x128xf32>,
    return
  }
  func.func @transform_0(%arg0: i32) -> (i32, i32) {
    %c0_i32 = arith.constant 0 : i32
    %c0_i32_0 = arith.constant 0 : i32
    return %arg0, %c0_i32 : i32, i32
  }
  func.func @transform_1(%arg0: i32) -> (i32, i32) {
    %c0_i32 = arith.constant 0 : i32
    %c0_i32_0 = arith.constant 0 : i32
    %c0_i32_1 = arith.constant 0 : i32
    return %c0_i32, %c0_i32_0 : i32, i32
  }
  func.func @transform_2(%arg0: i32) -> (i32, i32) {
    %c0_i32 = arith.constant 0 : i32
    %c0_i32_0 = arith.constant 0 : i32
    %c0_i32_1 = arith.constant 0 : i32
    return %c0_i32, %c0_i32_0 : i32, i32
  }
  func.func @transform_3(%arg0: i32) -> (i32, i32) {
    %c0_i32 = arith.constant 0 : i32
    %c0_i32_0 = arith.constant 0 : i32
    %c0_i32_1 = arith.constant 0 : i32
    return %c0_i32, %c0_i32_0 : i32, i32
  }
  func.func @transform_4(%arg0: i32) -> (i32, i32) {
    %c0_i32 = arith.constant 0 : i32
    %c0_i32_0 = arith.constant 0 : i32
    %c0_i32_1 = arith.constant 0 : i32
    return %c0_i32, %c0_i32_0 : i32, i32
  }
  func.func @transform_5(%arg0: i32) -> (i32, i32) {
    %c0_i32 = arith.constant 0 : i32
    %c0_i32_0 = arith.constant 0 : i32
    return %arg0, %c0_i32 : i32, i32
  }
}

</mosaic_0001>

<llo_original>
// kernel: tpu_custom_call.1
$region0: #{tpu_custom_call.1}
  #allocation0 [shape = 'u32[]', space=smem, size = 0x4, offset = 0x4, fixed_abs, tag = 'smem constant byte address 0x4 - core index']
  #allocation1 [shape = 'u32[72,128]{1,0:T(1,128)}', space=vmem, size = 0x9000, scoped, tag = 'internal scratch']
  %s0 = inlined_call_operand.vmem [shape: f32[200,2], index: 0, kind: input, shape index: {}]
  %s1 = inlined_call_operand.vmem [shape: f32[2,128], index: 1, kind: input, shape index: {}]
  %s2 = inlined_call_operand.vmem [shape: f32[1,128], index: 2, kind: input, shape index: {}]
  %s3 = inlined_call_operand.vmem [shape: f32[128,128], index: 3, kind: input, shape index: {}]
  %s4 = inlined_call_operand.vmem [shape: f32[1,128], index: 4, kind: input, shape index: {}]
  %s5 = inlined_call_operand.hbm [shape: f32[200,128], index: 5, kind: output, shape index: {}]
  %s6 = sld [smem:[#allocation0]]
  $region30: #{tpu_custom_call.1} parent=0
    _
  %s8 = ssub.s32 1, %s6
  %s9 = scalar_select 0, %s8, %s6
  $region1: #{tpu_custom_call.1} parent=0
    #allocation2 [shape = 'u8[102400]{0}', space=vmem, size = 0x19000, scoped, tag = 'output window, operand 0, single buffered']
    #allocation3 [shape = 's32[1]{0}', space=sflag, size = 0x4, scoped, tag = 'scoped memory for tpu_custom_call.1']
    %10 = vsyncpa [#allocation3], 0
    // Predicated region
    $region2: #{tpu_custom_call.1} parent=1 // pred_check
      _
    $region3: #{tpu_custom_call.1} parent=1 // pred_check_branch
      %12 = sbr.rel (0) target = $region5
    $region4: #{tpu_custom_call.1} parent=1 // pred_region
      _
    $region5: #{tpu_custom_call.1} parent=1 // pred_fallthru
      _
    // Predicated region
    $region6: #{tpu_custom_call.1} parent=1 // pred_check
      _
    $region7: #{tpu_custom_call.1} parent=1 // pred_check_branch
      %14 = sbr.rel (0) target = $region9
    $region8: #{tpu_custom_call.1} parent=1 // pred_region
      _
    $region9: #{tpu_custom_call.1} parent=1 // pred_fallthru
      _
    // Predicated region
    $region10: #{tpu_custom_call.1} parent=1 // pred_check
      _
    $region11: #{tpu_custom_call.1} parent=1 // pred_check_branch
      %16 = sbr.rel (0) target = $region13
    $region12: #{tpu_custom_call.1} parent=1 // pred_region
      _
    $region13: #{tpu_custom_call.1} parent=1 // pred_fallthru
      _
    // Predicated region
    $region14: #{tpu_custom_call.1} parent=1 // pred_check
      _
    $region15: #{tpu_custom_call.1} parent=1 // pred_check_branch
      %18 = sbr.rel (0) target = $region17
    $region16: #{tpu_custom_call.1} parent=1 // pred_region
      _
    $region17: #{tpu_custom_call.1} parent=1 // pred_fallthru
      _
    // Predicated region
    $region18: #{tpu_custom_call.1} parent=1 // pred_check
      _
    $region19: #{tpu_custom_call.1} parent=1 // pred_check_branch
      %20 = sbr.rel (0) target = $region21
    $region20: #{tpu_custom_call.1} parent=1 // pred_region
      _
    $region21: #{tpu_custom_call.1} parent=1 // pred_fallthru
      _
    %v21 = vld [vmem:[%s0] sm:$0xff]
    %v22 = vld [vmem:[%s0 + $0x8] sm:$0xff]
    %v23 = vld [vmem:[%s0 + $0x10] sm:$0xff]
    %v24 = vld [vmem:[%s0 + $0x18] sm:$0xff]
    %v25 = vld [vmem:[%s0 + $0x20] sm:$0xff]
    %v26 = vld [vmem:[%s0 + $0x28] sm:$0xff]
    %v27 = vld [vmem:[%s0 + $0x30] sm:$0xff]
    %v28 = vld [vmem:[%s0 + $0x38] sm:$0xff]
    %v29 = vld [vmem:[%s0 + $0x40] sm:$0xff]
    %v30 = vld [vmem:[%s0 + $0x48] sm:$0xff]
    %v31 = vld [vmem:[%s0 + $0x50] sm:$0xff]
    %v32 = vld [vmem:[%s0 + $0x58] sm:$0xff]
    %v33 = vld [vmem:[%s0 + $0x60] sm:$0xff]
    %v34 = vld [vmem:[%s0 + $0x68] sm:$0xff]
    %v35 = vld [vmem:[%s0 + $0x70] sm:$0xff]
    %v36 = vld [vmem:[%s0 + $0x78] sm:$0xff]
    %v37 = vld [vmem:[%s0 + $0x80] sm:$0xff]
    %v38 = vld [vmem:[%s0 + $0x88] sm:$0xff]
    %v39 = vld [vmem:[%s0 + $0x90] sm:$0xff]
    %v40 = vld [vmem:[%s0 + $0x98] sm:$0xff]
    %v41 = vld [vmem:[%s0 + $0xa0] sm:$0xff]
    %v42 = vld [vmem:[%s0 + $0xa8] sm:$0xff]
    %v43 = vld [vmem:[%s0 + $0xb0] sm:$0xff]
    %v44 = vld [vmem:[%s0 + $0xb8] sm:$0xff]
    %v45 = vld [vmem:[%s0 + $0xc0] sm:$0xff]
    %v46 = vld [vmem:[%s1] sm:$0x3]
    %v47 = vld [vmem:[%s2] sm:$0x1]
    %v49 = vperm.slane %v47, 0
    %vm51 = vcmask 15360
    %v53 = vsel %vm51, %v21, 0
    %v56 = vsel %vm51, %v22, 0
    %v59 = vsel %vm51, %v23, 0
    %v62 = vsel %vm51, %v24, 0
    %v65 = vsel %vm51, %v25, 0
    %v68 = vsel %vm51, %v26, 0
    %v71 = vsel %vm51, %v27, 0
    %v74 = vsel %vm51, %v28, 0
    %v77 = vsel %vm51, %v29, 0
    %v80 = vsel %vm51, %v30, 0
    %v83 = vsel %vm51, %v31, 0
    %v86 = vsel %vm51, %v32, 0
    %v89 = vsel %vm51, %v33, 0
    %v92 = vsel %vm51, %v34, 0
    %v95 = vsel %vm51, %v35, 0
    %v98 = vsel %vm51, %v36, 0
    %v101 = vsel %vm51, %v37, 0
    %v104 = vsel %vm51, %v38, 0
    %v107 = vsel %vm51, %v39, 0
    %v110 = vsel %vm51, %v40, 0
    %v113 = vsel %vm51, %v41, 0
    %v116 = vsel %vm51, %v42, 0
    %v119 = vsel %vm51, %v43, 0
    %v122 = vsel %vm51, %v44, 0
    %v125 = vsel %vm51, %v45, 0
    %vm127 = vcmask 1041408
    %v129 = vsel %vm127, %v46, 0
    %131 = vmatpush.msra.mxu0 0.0
    %132 = vmatpush.msra.mxu0 0.0
    %133 = vmatpush.msra.mxu0 0.0
    %134 = vmatpush.msra.mxu0 0.0
    %135 = vmatpush.msra.mxu0 0.0
    %136 = vmatpush.msra.mxu0 0.0
    %137 = vmatpush.msra.mxu0 0.0
    %138 = vmatpush.msra.mxu0 0.0
    %139 = vmatpush.msra.mxu0 0.0
    %140 = vmatpush.msra.mxu0 0.0
    %141 = vmatpush.msra.mxu0 0.0
    %142 = vmatpush.msra.mxu0 0.0
    %143 = vmatpush.msra.mxu0 0.0
    %144 = vmatpush.msra.mxu0 0.0
    %145 = vmatpush.msra.mxu0 0.0
    %146 = vmatpush.msra.mxu0 %v129
    %147 = vmatmul.f32.gmra.mxu0 %v53
    %v148 = vpop.f32.mrf.mxu0
    %v149 = vadd.f32 %v49, %v148
    %150 = vmatmul.f32.gmra.mxu0 %v56
    %v151 = vpop.f32.mrf.mxu0
    %v152 = vadd.f32 %v49, %v151
    %153 = vmatmul.f32.gmra.mxu0 %v59
    %v154 = vpop.f32.mrf.mxu0
    %v155 = vadd.f32 %v49, %v154
    %156 = vmatmul.f32.gmra.mxu0 %v62
    %v157 = vpop.f32.mrf.mxu0
    %v158 = vadd.f32 %v49, %v157
    %159 = vmatmul.f32.gmra.mxu0 %v65
    %v160 = vpop.f32.mrf.mxu0
    %v161 = vadd.f32 %v49, %v160
    %162 = vmatmul.f32.gmra.mxu0 %v68
    %v163 = vpop.f32.mrf.mxu0
    %v164 = vadd.f32 %v49, %v163
    %165 = vmatmul.f32.gmra.mxu0 %v71
    %v166 = vpop.f32.mrf.mxu0
    %v167 = vadd.f32 %v49, %v166
    %168 = vmatmul.f32.gmra.mxu0 %v74
    %v169 = vpop.f32.mrf.mxu0
    %v170 = vadd.f32 %v49, %v169
    %171 = vmatmul.f32.gmra.mxu0 %v77
    %v172 = vpop.f32.mrf.mxu0
    %v173 = vadd.f32 %v49, %v172
    %174 = vmatmul.f32.gmra.mxu0 %v80
    %v175 = vpop.f32.mrf.mxu0
    %v176 = vadd.f32 %v49, %v175
    %177 = vmatmul.f32.gmra.mxu0 %v83
    %v178 = vpop.f32.mrf.mxu0
    %v179 = vadd.f32 %v49, %v178
    %180 = vmatmul.f32.gmra.mxu0 %v86
    %v181 = vpop.f32.mrf.mxu0
    %v182 = vadd.f32 %v49, %v181
    %183 = vmatmul.f32.gmra.mxu0 %v89
    %v184 = vpop.f32.mrf.mxu0
    %v185 = vadd.f32 %v49, %v184
    %186 = vmatmul.f32.gmra.mxu0 %v92
    %v187 = vpop.f32.mrf.mxu0
    %v188 = vadd.f32 %v49, %v187
    %189 = vmatmul.f32.gmra.mxu0 %v95
    %v190 = vpop.f32.mrf.mxu0
    %v191 = vadd.f32 %v49, %v190
    %192 = vmatmul.f32.gmra.mxu0 %v98
    %v193 = vpop.f32.mrf.mxu0
    %v194 = vadd.f32 %v49, %v193
    %195 = vmatmul.f32.gmra.mxu0 %v101
    %v196 = vpop.f32.mrf.mxu0
    %v197 = vadd.f32 %v49, %v196
    %198 = vmatmul.f32.gmra.mxu0 %v104
    %v199 = vpop.f32.mrf.mxu0
    %v200 = vadd.f32 %v49, %v199
    %201 = vmatmul.f32.gmra.mxu0 %v107
    %v202 = vpop.f32.mrf.mxu0
    %v203 = vadd.f32 %v49, %v202
    %204 = vmatmul.f32.gmra.mxu0 %v110
    %v205 = vpop.f32.mrf.mxu0
    %v206 = vadd.f32 %v49, %v205
    %207 = vmatmul.f32.gmra.mxu0 %v113
    %v208 = vpop.f32.mrf.mxu0
    %v209 = vadd.f32 %v49, %v208
    %210 = vmatmul.f32.gmra.mxu0 %v116
    %v211 = vpop.f32.mrf.mxu0
    %v212 = vadd.f32 %v49, %v211
    %213 = vmatmul.f32.gmra.mxu0 %v119
    %v214 = vpop.f32.mrf.mxu0
    %v215 = vadd.f32 %v49, %v214
    %216 = vmatmul.f32.gmra.mxu0 %v122
    %v217 = vpop.f32.mrf.mxu0
    %v218 = vadd.f32 %v49, %v217
    %219 = vmatmul.f32.gmra.mxu0 %v125
    %v220 = vpop.f32.mrf.mxu0
    %v221 = vadd.f32 %v49, %v220
    %222 = vdwg.mxu0
    %v223 = vmax.f32 %v149, 0.0
    %v224 = vmax.f32 %v152, 0.0
    %v225 = vmax.f32 %v155, 0.0
    %v226 = vmax.f32 %v158, 0.0
    %v227 = vmax.f32 %v161, 0.0
    %v228 = vmax.f32 %v164, 0.0
    %v229 = vmax.f32 %v167, 0.0
    %v230 = vmax.f32 %v170, 0.0
    %v231 = vmax.f32 %v173, 0.0
    %v232 = vmax.f32 %v176, 0.0
    %v233 = vmax.f32 %v179, 0.0
    %v234 = vmax.f32 %v182, 0.0
    %v235 = vmax.f32 %v185, 0.0
    %v236 = vmax.f32 %v188, 0.0
    %v237 = vmax.f32 %v191, 0.0
    %v238 = vmax.f32 %v194, 0.0
    %v239 = vmax.f32 %v197, 0.0
    %v240 = vmax.f32 %v200, 0.0
    %v241 = vmax.f32 %v203, 0.0
    %v242 = vmax.f32 %v206, 0.0
    %v243 = vmax.f32 %v209, 0.0
    %v244 = vmax.f32 %v212, 0.0
    %v245 = vmax.f32 %v215, 0.0
    %v246 = vmax.f32 %v218, 0.0
    %v247 = vmax.f32 %v221, 0.0
    %v248 = vld [vmem:[%s3] sm:$0xff]
    %v249 = vld [vmem:[%s3 + $0x8] sm:$0xff]
    %v250 = vld [vmem:[%s3 + $0x10] sm:$0xff]
    %v251 = vld [vmem:[%s3 + $0x18] sm:$0xff]
    %v252 = vld [vmem:[%s3 + $0x20] sm:$0xff]
    %v253 = vld [vmem:[%s3 + $0x28] sm:$0xff]
    %v254 = vld [vmem:[%s3 + $0x30] sm:$0xff]
    %v255 = vld [vmem:[%s3 + $0x38] sm:$0xff]
    %v256 = vld [vmem:[%s3 + $0x40] sm:$0xff]
    %v257 = vld [vmem:[%s3 + $0x48] sm:$0xff]
    %v258 = vld [vmem:[%s3 + $0x50] sm:$0xff]
    %v259 = vld [vmem:[%s3 + $0x58] sm:$0xff]
    %v260 = vld [vmem:[%s3 + $0x60] sm:$0xff]
    %v261 = vld [vmem:[%s3 + $0x68] sm:$0xff]
    %v262 = vld [vmem:[%s3 + $0x70] sm:$0xff]
    %v263 = vld [vmem:[%s3 + $0x78] sm:$0xff]
    %v264 = vld [vmem:[%s4] sm:$0x1]
    %v266 = vperm.slane %v264, 0
    %268 = vmatpush.msra.mxu0 %v263
    %269 = vmatpush.msra.mxu0 %v262
    %270 = vmatpush.msra.mxu0 %v261
    %271 = vmatpush.msra.mxu0 %v260
    %272 = vmatpush.msra.mxu0 %v259
    %273 = vmatpush.msra.mxu0 %v258
    %274 = vmatpush.msra.mxu0 %v257
    %275 = vmatpush.msra.mxu0 %v256
    %276 = vmatpush.msra.mxu0 %v255
    %277 = vmatpush.msra.mxu0 %v254
    %278 = vmatpush.msra.mxu0 %v253
    %279 = vmatpush.msra.mxu0 %v252
    %280 = vmatpush.msra.mxu0 %v251
    %281 = vmatpush.msra.mxu0 %v250
    %282 = vmatpush.msra.mxu0 %v249
    %283 = vmatpush.msra.mxu0 %v248
    %284 = vmatmul.f32.gmra.mxu0 %v223
    %v285 = vpop.f32.mrf.mxu0
    %v286 = vadd.f32 %v266, %v285
    %287 = vmatmul.f32.gmra.mxu0 %v224
    %v288 = vpop.f32.mrf.mxu0
    %v289 = vadd.f32 %v266, %v288
    %290 = vmatmul.f32.gmra.mxu0 %v225
    %v291 = vpop.f32.mrf.mxu0
    %v292 = vadd.f32 %v266, %v291
    %293 = vmatmul.f32.gmra.mxu0 %v226
    %v294 = vpop.f32.mrf.mxu0
    %v295 = vadd.f32 %v266, %v294
    %296 = vmatmul.f32.gmra.mxu0 %v227
    %v297 = vpop.f32.mrf.mxu0
    %v298 = vadd.f32 %v266, %v297
    %299 = vmatmul.f32.gmra.mxu0 %v228
    %v300 = vpop.f32.mrf.mxu0
    %v301 = vadd.f32 %v266, %v300
    %302 = vmatmul.f32.gmra.mxu0 %v229
    %v303 = vpop.f32.mrf.mxu0
    %v304 = vadd.f32 %v266, %v303
    %305 = vmatmul.f32.gmra.mxu0 %v230
    %v306 = vpop.f32.mrf.mxu0
    %v307 = vadd.f32 %v266, %v306
    %308 = vmatmul.f32.gmra.mxu0 %v231
    %v309 = vpop.f32.mrf.mxu0
    %v310 = vadd.f32 %v266, %v309
    %311 = vmatmul.f32.gmra.mxu0 %v232
    %v312 = vpop.f32.mrf.mxu0
    %v313 = vadd.f32 %v266, %v312
    %314 = vmatmul.f32.gmra.mxu0 %v233
    %v315 = vpop.f32.mrf.mxu0
    %v316 = vadd.f32 %v266, %v315
    %317 = vmatmul.f32.gmra.mxu0 %v234
    %v318 = vpop.f32.mrf.mxu0
    %v319 = vadd.f32 %v266, %v318
    %320 = vmatmul.f32.gmra.mxu0 %v235
    %v321 = vpop.f32.mrf.mxu0
    %v322 = vadd.f32 %v266, %v321
    %323 = vmatmul.f32.gmra.mxu0 %v236
    %v324 = vpop.f32.mrf.mxu0
    %v325 = vadd.f32 %v266, %v324
    %326 = vmatmul.f32.gmra.mxu0 %v237
    %v327 = vpop.f32.mrf.mxu0
    %v328 = vadd.f32 %v266, %v327
    %329 = vmatmul.f32.gmra.mxu0 %v238
    %v330 = vpop.f32.mrf.mxu0
    %v331 = vadd.f32 %v266, %v330
    %332 = vmatmul.f32.gmra.mxu0 %v239
    %v333 = vpop.f32.mrf.mxu0
    %v334 = vadd.f32 %v266, %v333
    %335 = vmatmul.f32.gmra.mxu0 %v240
    %v336 = vpop.f32.mrf.mxu0
    %v337 = vadd.f32 %v266, %v336
    %338 = vmatmul.f32.gmra.mxu0 %v241
    %v339 = vpop.f32.mrf.mxu0
    %v340 = vadd.f32 %v266, %v339
    %341 = vmatmul.f32.gmra.mxu0 %v242
    %v342 = vpop.f32.mrf.mxu0
    %v343 = vadd.f32 %v266, %v342
    %344 = vmatmul.f32.gmra.mxu0 %v243
    %v345 = vpop.f32.mrf.mxu0
    %v346 = vadd.f32 %v266, %v345
    %347 = vmatmul.f32.gmra.mxu0 %v244
    %v348 = vpop.f32.mrf.mxu0
    %v349 = vadd.f32 %v266, %v348
    %350 = vmatmul.f32.gmra.mxu0 %v245
    %v351 = vpop.f32.mrf.mxu0
    %v352 = vadd.f32 %v266, %v351
    %353 = vmatmul.f32.gmra.mxu0 %v246
    %v354 = vpop.f32.mrf.mxu0
    %v355 = vadd.f32 %v266, %v354
    %356 = vmatmul.f32.gmra.mxu0 %v247
    %v357 = vpop.f32.mrf.mxu0
    %v358 = vadd.f32 %v266, %v357
    %359 = vdwg.mxu0
    %360 = vst [vmem:[#allocation2] sm:$0xff] %v286
    %361 = vst [vmem:[#allocation2 + $0x8] sm:$0xff] %v289
    %362 = vst [vmem:[#allocation2 + $0x10] sm:$0xff] %v292
    %363 = vst [vmem:[#allocation2 + $0x18] sm:$0xff] %v295
    %364 = vst [vmem:[#allocation2 + $0x20] sm:$0xff] %v298
    %365 = vst [vmem:[#allocation2 + $0x28] sm:$0xff] %v301
    %366 = vst [vmem:[#allocation2 + $0x30] sm:$0xff] %v304
    %367 = vst [vmem:[#allocation2 + $0x38] sm:$0xff] %v307
    %368 = vst [vmem:[#allocation2 + $0x40] sm:$0xff] %v310
    %369 = vst [vmem:[#allocation2 + $0x48] sm:$0xff] %v313
    %370 = vst [vmem:[#allocation2 + $0x50] sm:$0xff] %v316
    %371 = vst [vmem:[#allocation2 + $0x58] sm:$0xff] %v319
    %372 = vst [vmem:[#allocation2 + $0x60] sm:$0xff] %v322
    %373 = vst [vmem:[#allocation2 + $0x68] sm:$0xff] %v325
    %374 = vst [vmem:[#allocation2 + $0x70] sm:$0xff] %v328
    %375 = vst [vmem:[#allocation2 + $0x78] sm:$0xff] %v331
    %376 = vst [vmem:[#allocation2 + $0x80] sm:$0xff] %v334
    %377 = vst [vmem:[#allocation2 + $0x88] sm:$0xff] %v337
    %378 = vst [vmem:[#allocation2 + $0x90] sm:$0xff] %v340
    %379 = vst [vmem:[#allocation2 + $0x98] sm:$0xff] %v343
    %380 = vst [vmem:[#allocation2 + $0xa0] sm:$0xff] %v346
    %381 = vst [vmem:[#allocation2 + $0xa8] sm:$0xff] %v349
    %382 = vst [vmem:[#allocation2 + $0xb0] sm:$0xff] %v352
    %383 = vst [vmem:[#allocation2 + $0xb8] sm:$0xff] %v355
    %384 = vst [vmem:[#allocation2 + $0xc0] sm:$0xff] %v358
    // Predicated region
    $region22: #{tpu_custom_call.1} parent=1 // pred_check
      _
    $region23: #{tpu_custom_call.1} parent=1 // pred_check_branch
      %386 = sbr.rel (0) target = $region25
    $region24: #{tpu_custom_call.1} parent=1 // pred_region
      %388 = vsyncadd [#allocation3], 0
      %s389 = sshll.u32 [#allocation2], 4
      %s390 = int_to_ptr.vmem [resolvable:$true] %s389
      %s391 = sshll.u32 %s5, 4
      %s392 = int_to_ptr.hbm [resolvable:$true] %s391
      %397 = dma.vmem_to_hbm [thread:$0]  %s390, 3200, %s392, [#allocation3], 128, 128, 8
    $region25: #{tpu_custom_call.1} parent=1 // pred_fallthru
      _
    // Predicated region
    $region26: #{tpu_custom_call.1} parent=1 // pred_check
      _
    $region27: #{tpu_custom_call.1} parent=1 // pred_check_branch
      %399 = sbr.rel (0) target = $region29
    $region28: #{tpu_custom_call.1} parent=1 // pred_region
      %401 = dma.done [#allocation3], 3200
    $region29: #{tpu_custom_call.1} parent=1 // pred_fallthru
      _
    %402 = vsyncpa [#allocation3], 1

</llo_original>
